<compile_context>
chip_gen: v7x
topology: tpu7x:2x2x1
jax: 0.10.0
libtpu: 0.0.40
codegen_flags: <defaults>
</compile_context>

<pallas_src>
import jax
import jax.numpy as jnp
from jax.experimental import pallas as pl
from jax.experimental.pallas import tpu as pltpu

DIMS = [11, 50, 150, 150, 25, 25, 2]
TILE_B = 512


def _mlp_kernel(x_ref,
                w1_ref, b1_ref,
                w2_ref, b2_ref,
                w3_ref, b3_ref,
                w4_ref, b4_ref,
                w5_ref, b5_ref,
                w6_ref, b6_ref,
                o_ref):
    """Fused 6-layer MLP forward (ReLU between layers, none on the last)."""
    # bf16 LHS for the MXU; accumulation stays f32.
    h = x_ref[...].astype(jnp.bfloat16)

    def linear_relu(h_bf16, w_ref, b_ref):
        y = jnp.dot(h_bf16, w_ref[...], preferred_element_type=jnp.float32)
        y = jnp.maximum(y + b_ref[...], 0.0)      # bias/ReLU in f32 (VPU)
        return y.astype(jnp.bfloat16)             # back to bf16 for next MXU op

    h = linear_relu(h, w1_ref, b1_ref)
    h = linear_relu(h, w2_ref, b2_ref)
    h = linear_relu(h, w3_ref, b3_ref)
    h = linear_relu(h, w4_ref, b4_ref)
    h = linear_relu(h, w5_ref, b5_ref)
    # fc6: linear only, no activation
    y = jnp.dot(h, w6_ref[...], preferred_element_type=jnp.float32) + b6_ref[...]
    o_ref[...] = y.astype(o_ref.dtype)


def _round_up(n, m):
    return ((n + m - 1) // m) * m


def mlp_forward(x, params, tile_b=TILE_B):
    """x: [B, 11] float32. params: list of (W[in,out] f32, b[1,out] f32) x 6."""
    B, in_dim = x.shape
    out_dim = params[-1][0].shape[1]

    # Small batches: shrink the tile (rounded to the 8-sublane granule) so we
    # don't burn a full 512-row block of dead MXU work. Large batches: cap at
    # tile_b and pad the batch so every grid step is full.
    tile_b = min(tile_b, _round_up(max(B, 1), 8))
    num_blocks = pl.cdiv(B, tile_b)
    B_pad = num_blocks * tile_b
    if B_pad != B:
        x = jnp.pad(x, ((0, B_pad - B), (0, 0)))

    # Weights in bf16 for the MXU; biases stay f32 for the VPU add.
    # Constant index_map -> DMA'd once, resident in VMEM across all grid steps.
    flat_params = []
    flat_specs = []
    weight_bytes = 0
    for w, b in params:
        w_bf16 = w.astype(jnp.bfloat16)
        flat_params.append(w_bf16)
        flat_specs.append(pl.BlockSpec(w.shape, lambda i: (0, 0)))   # resident
        flat_params.append(b)
        flat_specs.append(pl.BlockSpec(b.shape, lambda i: (0, 0)))   # resident
        weight_bytes += w_bf16.size * 2 + b.size * 4

    flops = 2 * B_pad * sum(DIMS[i] * DIMS[i + 1] for i in range(len(DIMS) - 1))
    bytes_accessed = B_pad * (in_dim + out_dim) * 4 + weight_bytes

    out = pl.pallas_call(
        _mlp_kernel,
        out_shape=jax.ShapeDtypeStruct((B_pad, out_dim), jnp.float32),
        grid=(num_blocks,),
        in_specs=[pl.BlockSpec((tile_b, in_dim), lambda i: (i, 0))] + flat_specs,
        out_specs=pl.BlockSpec((tile_b, out_dim), lambda i: (i, 0)),
        compiler_params=pltpu.CompilerParams(
            dimension_semantics=("parallel",)),
        cost_estimate=pl.CostEstimate(
            flops=flops, bytes_accessed=bytes_accessed, transcendentals=0),
    )(x, *flat_params)

    return out[:B]


def init_params(key):
    """Deterministic init matching nn.Linear shapes (stored as [in, out])."""
    params = []
    for i in range(len(DIMS) - 1):
        fan_in, fan_out = DIMS[i], DIMS[i + 1]
        key, kw, kb = jax.random.split(key, 3)
        bound = 1.0 / jnp.sqrt(fan_in)
        w = jax.random.uniform(kw, (fan_in, fan_out), jnp.float32, -bound, bound)
        b = jax.random.uniform(kb, (1, fan_out), jnp.float32, -bound, bound)
        params.append((w, b))
    return params


def reference_forward(x, params):
    """Pure-JAX reference mirroring the kernel's bf16-operand / f32-accum path."""
    h = x.astype(jnp.bfloat16)
    for i, (w, b) in enumerate(params):
        y = jnp.dot(h, w.astype(jnp.bfloat16),
                    preferred_element_type=jnp.float32) + b
        if i < len(params) - 1:
            h = jnp.maximum(y, 0.0).astype(jnp.bfloat16)
        else:
            h = y
    return h


if __name__ == "__main__":
    key = jax.random.PRNGKey(0)
    key, kx1, kx2 = jax.random.split(key, 3)
    params = init_params(key)

    # Small-batch check (single small block, exercises the adaptive tile path).
    B = 8
    x = jax.random.normal(kx1, (B, 11), dtype=jnp.float32)
    out = jax.block_until_ready(mlp_forward(x, params))
    ref = reference_forward(x, params)
    assert out.shape == (B, 2), out.shape
    assert jnp.allclose(out, ref, atol=2e-3, rtol=2e-3), "mismatch vs reference (B=8)"

    # Larger batch that is not a multiple of the tile (exercises padding,
    # multi-block grid, and the parallel batch axis).
    B2 = 600
    x2 = jax.random.normal(kx2, (B2, 11), dtype=jnp.float32)
    out2 = jax.block_until_ready(mlp_forward(x2, params))
    ref2 = reference_forward(x2, params)
    assert out2.shape == (B2, 2), out2.shape
    assert jnp.allclose(out2, ref2, atol=2e-3, rtol=2e-3), "mismatch vs reference (B=600)"

    print("KERNEL_OK")
</pallas_src>

<mosaic_0001>
module attributes {stable_mosaic.version = 11 : i64} {
  func.func @_mlp_kernel(%arg0: i32, %arg1: memref<8x11xf32, #tpu.memory_space<vmem>>, %arg2: memref<11x50xbf16, #tpu.memory_space<vmem>>, %arg3: memref<1x50xf32, #tpu.memory_space<vmem>>, %arg4: memref<50x150xbf16, #tpu.memory_space<vmem>>, %arg5: memref<1x150xf32, #tpu.memory_space<vmem>>, %arg6: memref<150x150xbf16, #tpu.memory_space<vmem>>, %arg7: memref<1x150xf32, #tpu.memory_space<vmem>>, %arg8: memref<150x25xbf16, #tpu.memory_space<vmem>>, %arg9: memref<1x25xf32, #tpu.memory_space<vmem>>, %arg10: memref<25x25xbf16, #tpu.memory_space<vmem>>, %arg11: memref<1x25xf32, #tpu.memory_space<vmem>>, %arg12: memref<25x2xbf16, #tpu.memory_space<vmem>>, %arg13: memref<1x2xf32, #tpu.memory_space<vmem>>, %arg14: memref<8x2xf32, #tpu.memory_space<vmem>>) attributes {dimension_semantics = [#tpu.dimension_semantics<parallel>], iteration_bounds = array<i64: 1>, scalar_prefetch = 0 : i64, scratch_operands = 0 : i64, tpu.core_type = #tpu.core_type<tc>, window_params = [{transform_indices = @transform_0, window_bounds = array<i64: 8, 11>}, {pipeline_mode = #tpu.pipeline_mode<synchronous>, transform_indices = @transform_1, window_bounds = array<i64: 11, 50>}, {pipeline_mode = #tpu.pipeline_mode<synchronous>, transform_indices = @transform_2, window_bounds = array<i64: 1, 50>}, {pipeline_mode = #tpu.pipeline_mode<synchronous>, transform_indices = @transform_3, window_bounds = array<i64: 50, 150>}, {pipeline_mode = #tpu.pipeline_mode<synchronous>, transform_indices = @transform_4, window_bounds = array<i64: 1, 150>}, {pipeline_mode = #tpu.pipeline_mode<synchronous>, transform_indices = @transform_5, window_bounds = array<i64: 150, 150>}, {pipeline_mode = #tpu.pipeline_mode<synchronous>, transform_indices = @transform_6, window_bounds = array<i64: 1, 150>}, {pipeline_mode = #tpu.pipeline_mode<synchronous>, transform_indices = @transform_7, window_bounds = array<i64: 150, 25>}, {pipeline_mode = #tpu.pipeline_mode<synchronous>, transform_indices = @transform_8, window_bounds = array<i64: 1, 25>}, {pipeline_mode = #tpu.pipeline_mode<synchronous>, transform_indices = @transform_9, window_bounds = array<i64: 25, 25>}, {pipeline_mode = #tpu.pipeline_mode<synchronous>, transform_indices = @transform_10, window_bounds = array<i64: 1, 25>}, {pipeline_mode = #tpu.pipeline_mode<synchronous>, transform_indices = @transform_11, window_bounds = array<i64: 25, 2>}, {pipeline_mode = #tpu.pipeline_mode<synchronous>, transform_indices = @transform_12, window_bounds = array<i64: 1, 2>}, {transform_indices = @transform_13, window_bounds = array<i64: 8, 2>}]} {
    %c0 = arith.constant 0 : index
    %c0_0 = arith.constant 0 : index
    %0 = vector.load %arg1[%c0, %c0_0] : memref<8x11xf32, #tpu.memory_space<vmem>>, vector<8x11xf32>
    %1 = arith.truncf %0 : vector<8x11xf32> to vector<8x11xbf16>
    %c0_1 = arith.constant 0 : index
    %c0_2 = arith.constant 0 : index
    %2 = vector.load %arg2[%c0_1, %c0_2] : memref<11x50xbf16, #tpu.memory_space<vmem>>, vector<11x50xbf16>
    %cst = arith.constant dense<0.000000e+00> : vector<8x50xf32>
    %3 = tpu.matmul %1, %2, %cst {dimension_numbers = #tpu.dot_dimension_numbers<[1], [0], [0], [1], [0, 0, 1, 1], [], []>} : vector<8x11xbf16>, vector<11x50xbf16>, vector<8x50xf32> -> vector<8x50xf32>
    %c0_3 = arith.constant 0 : index
    %c0_4 = arith.constant 0 : index
    %4 = vector.load %arg3[%c0_3, %c0_4] : memref<1x50xf32, #tpu.memory_space<vmem>>, vector<1x50xf32>
    %5 = vector.broadcast %4 : vector<1x50xf32> to vector<8x50xf32>
    %6 = arith.addf %3, %5 : vector<8x50xf32>
    %cst_5 = arith.constant 0.000000e+00 : f32
    %7 = vector.broadcast %cst_5 : f32 to vector<8x50xf32>
    %8 = arith.maximumf %6, %7 : vector<8x50xf32>
    %9 = arith.truncf %8 : vector<8x50xf32> to vector<8x50xbf16>
    %c0_6 = arith.constant 0 : index
    %c0_7 = arith.constant 0 : index
    %10 = vector.load %arg4[%c0_6, %c0_7] : memref<50x150xbf16, #tpu.memory_space<vmem>>, vector<50x150xbf16>
    %cst_8 = arith.constant dense<0.000000e+00> : vector<8x150xf32>
    %11 = tpu.matmul %9, %10, %cst_8 {dimension_numbers = #tpu.dot_dimension_numbers<[1], [0], [0], [1], [0, 0, 1, 1], [], []>} : vector<8x50xbf16>, vector<50x150xbf16>, vector<8x150xf32> -> vector<8x150xf32>
    %c0_9 = arith.constant 0 : index
    %c0_10 = arith.constant 0 : index
    %12 = vector.load %arg5[%c0_9, %c0_10] : memref<1x150xf32, #tpu.memory_space<vmem>>, vector<1x150xf32>
    %13 = vector.broadcast %12 : vector<1x150xf32> to vector<8x150xf32>
    %14 = arith.addf %11, %13 : vector<8x150xf32>
    %cst_11 = arith.constant 0.000000e+00 : f32
    %15 = vector.broadcast %cst_11 : f32 to vector<8x150xf32>
    %16 = arith.maximumf %14, %15 : vector<8x150xf32>
    %17 = arith.truncf %16 : vector<8x150xf32> to vector<8x150xbf16>
    %c0_12 = arith.constant 0 : index
    %c0_13 = arith.constant 0 : index
    %18 = vector.load %arg6[%c0_12, %c0_13] : memref<150x150xbf16, #tpu.memory_space<vmem>>, vector<150x150xbf16>
    %cst_14 = arith.constant dense<0.000000e+00> : vector<8x150xf32>
    %19 = tpu.matmul %17, %18, %cst_14 {dimension_numbers = #tpu.dot_dimension_numbers<[1], [0], [0], [1], [0, 0, 1, 1], [], []>} : vector<8x150xbf16>, vector<150x150xbf16>, vector<8x150xf32> -> vector<8x150xf32>
    %c0_15 = arith.constant 0 : index
    %c0_16 = arith.constant 0 : index
    %20 = vector.load %arg7[%c0_15, %c0_16] : memref<1x150xf32, #tpu.memory_space<vmem>>, vector<1x150xf32>
    %21 = vector.broadcast %20 : vector<1x150xf32> to vector<8x150xf32>
    %22 = arith.addf %19, %21 : vector<8x150xf32>
    %cst_17 = arith.constant 0.000000e+00 : f32
    %23 = vector.broadcast %cst_17 : f32 to vector<8x150xf32>
    %24 = arith.maximumf %22, %23 : vector<8x150xf32>
    %25 = arith.truncf %24 : vector<8x150xf32> to vector<8x150xbf16>
    %c0_18 = arith.constant 0 : index
    %c0_19 = arith.constant 0 : index
    %26 = vector.load %arg8[%c0_18, %c0_19] : memref<150x25xbf16, #tpu.memory_space<vmem>>, vector<150x25xbf16>
    %cst_20 = arith.constant dense<0.000000e+00> : vector<8x25xf32>
    %27 = tpu.matmul %25, %26, %cst_20 {dimension_numbers = #tpu.dot_dimension_numbers<[1], [0], [0], [1], [0, 0, 1, 1], [], []>} : vector<8x150xbf16>, vector<150x25xbf16>, vector<8x25xf32> -> vector<8x25xf32>
    %c0_21 = arith.constant 0 : index
    %c0_22 = arith.constant 0 : index
    %28 = vector.load %arg9[%c0_21, %c0_22] : memref<1x25xf32, #tpu.memory_space<vmem>>, vector<1x25xf32>
    %29 = vector.broadcast %28 : vector<1x25xf32> to vector<8x25xf32>
    %30 = arith.addf %27, %29 : vector<8x25xf32>
    %cst_23 = arith.constant 0.000000e+00 : f32
    %31 = vector.broadcast %cst_23 : f32 to vector<8x25xf32>
    %32 = arith.maximumf %30, %31 : vector<8x25xf32>
    %33 = arith.truncf %32 : vector<8x25xf32> to vector<8x25xbf16>
    %c0_24 = arith.constant 0 : index
    %c0_25 = arith.constant 0 : index
    %34 = vector.load %arg10[%c0_24, %c0_25] : memref<25x25xbf16, #tpu.memory_space<vmem>>, vector<25x25xbf16>
    %cst_26 = arith.constant dense<0.000000e+00> : vector<8x25xf32>
    %35 = tpu.matmul %33, %34, %cst_26 {dimension_numbers = #tpu.dot_dimension_numbers<[1], [0], [0], [1], [0, 0, 1, 1], [], []>} : vector<8x25xbf16>, vector<25x25xbf16>, vector<8x25xf32> -> vector<8x25xf32>
    %c0_27 = arith.constant 0 : index
    %c0_28 = arith.constant 0 : index
    %36 = vector.load %arg11[%c0_27, %c0_28] : memref<1x25xf32, #tpu.memory_space<vmem>>, vector<1x25xf32>
    %37 = vector.broadcast %36 : vector<1x25xf32> to vector<8x25xf32>
    %38 = arith.addf %35, %37 : vector<8x25xf32>
    %cst_29 = arith.constant 0.000000e+00 : f32
    %39 = vector.broadcast %cst_29 : f32 to vector<8x25xf32>
    %40 = arith.maximumf %38, %39 : vector<8x25xf32>
    %41 = arith.truncf %40 : vector<8x25xf32> to vector<8x25xbf16>
    %c0_30 = arith.constant 0 : index
    %c0_31 = arith.constant 0 : index
    %42 = vector.load %arg12[%c0_30, %c0_31] : memref<25x2xbf16, #tpu.memory_space<vmem>>, vector<25x2xbf16>
    %cst_32 = arith.constant dense<0.000000e+00> : vector<8x2xf32>
    %43 = tpu.matmul %41, %42, %cst_32 {dimension_numbers = #tpu.dot_dimension_numbers<[1], [0], [0], [1], [0, 0, 1, 1], [], []>} : vector<8x25xbf16>, vector<25x2xbf16>, vector<8x2xf32> -> vector<8x2xf32>
    %c0_33 = arith.constant 0 : index
    %c0_34 = arith.constant 0 : index
    %44 = vector.load %arg13[%c0_33, %c0_34] : memref<1x2xf32, #tpu.memory_space<vmem>>, vector<1x2xf32>
    %45 = vector.broadcast %44 : vector<1x2xf32> to vector<8x2xf32>
    %46 = arith.addf %43, %45 : vector<8x2xf32>
    %c0_35 = arith.constant 0 : index
    %c0_36 = arith.constant 0 : index
    %47 = vector.load %arg14[%c0_35, %c0_36] : memref<8x2xf32, #tpu.memory_space<vmem>>, vector<8x2xf32>
    tpu.vector_store %arg14[%c0_35, %c0_36], %46 {strides = array<i32>} : memref<8x2xf32, #tpu.memory_space<vmem>>, vector<8x2xf32>,
    return
  }
  func.func @transform_0(%arg0: i32) -> (i32, i32) {
    %c0_i32 = arith.constant 0 : i32
    %c0_i32_0 = arith.constant 0 : i32
    return %arg0, %c0_i32 : i32, i32
  }
  func.func @transform_1(%arg0: i32) -> (i32, i32) {
    %c0_i32 = arith.constant 0 : i32
    %c0_i32_0 = arith.constant 0 : i32
    %c0_i32_1 = arith.constant 0 : i32
    return %c0_i32, %c0_i32_0 : i32, i32
  }
  func.func @transform_2(%arg0: i32) -> (i32, i32) {
    %c0_i32 = arith.constant 0 : i32
    %c0_i32_0 = arith.constant 0 : i32
    %c0_i32_1 = arith.constant 0 : i32
    return %c0_i32, %c0_i32_0 : i32, i32
  }
  func.func @transform_3(%arg0: i32) -> (i32, i32) {
    %c0_i32 = arith.constant 0 : i32
    %c0_i32_0 = arith.constant 0 : i32
    %c0_i32_1 = arith.constant 0 : i32
    return %c0_i32, %c0_i32_0 : i32, i32
  }
  func.func @transform_4(%arg0: i32) -> (i32, i32) {
    %c0_i32 = arith.constant 0 : i32
    %c0_i32_0 = arith.constant 0 : i32
    %c0_i32_1 = arith.constant 0 : i32
    return %c0_i32, %c0_i32_0 : i32, i32
  }
  func.func @transform_5(%arg0: i32) -> (i32, i32) {
    %c0_i32 = arith.constant 0 : i32
    %c0_i32_0 = arith.constant 0 : i32
    %c0_i32_1 = arith.constant 0 : i32
    return %c0_i32, %c0_i32_0 : i32, i32
  }
  func.func @transform_6(%arg0: i32) -> (i32, i32) {
    %c0_i32 = arith.constant 0 : i32
    %c0_i32_0 = arith.constant 0 : i32
    %c0_i32_1 = arith.constant 0 : i32
    return %c0_i32, %c0_i32_0 : i32, i32
  }
  func.func @transform_7(%arg0: i32) -> (i32, i32) {
    %c0_i32 = arith.constant 0 : i32
    %c0_i32_0 = arith.constant 0 : i32
    %c0_i32_1 = arith.constant 0 : i32
    return %c0_i32, %c0_i32_0 : i32, i32
  }
  func.func @transform_8(%arg0: i32) -> (i32, i32) {
    %c0_i32 = arith.constant 0 : i32
    %c0_i32_0 = arith.constant 0 : i32
    %c0_i32_1 = arith.constant 0 : i32
    return %c0_i32, %c0_i32_0 : i32, i32
  }
  func.func @transform_9(%arg0: i32) -> (i32, i32) {
    %c0_i32 = arith.constant 0 : i32
    %c0_i32_0 = arith.constant 0 : i32
    %c0_i32_1 = arith.constant 0 : i32
    return %c0_i32, %c0_i32_0 : i32, i32
  }
  func.func @transform_10(%arg0: i32) -> (i32, i32) {
    %c0_i32 = arith.constant 0 : i32
    %c0_i32_0 = arith.constant 0 : i32
    %c0_i32_1 = arith.constant 0 : i32
    return %c0_i32, %c0_i32_0 : i32, i32
  }
  func.func @transform_11(%arg0: i32) -> (i32, i32) {
    %c0_i32 = arith.constant 0 : i32
    %c0_i32_0 = arith.constant 0 : i32
    %c0_i32_1 = arith.constant 0 : i32
    return %c0_i32, %c0_i32_0 : i32, i32
  }
  func.func @transform_12(%arg0: i32) -> (i32, i32) {
    %c0_i32 = arith.constant 0 : i32
    %c0_i32_0 = arith.constant 0 : i32
    %c0_i32_1 = arith.constant 0 : i32
    return %c0_i32, %c0_i32_0 : i32, i32
  }
  func.func @transform_13(%arg0: i32) -> (i32, i32) {
    %c0_i32 = arith.constant 0 : i32
    %c0_i32_0 = arith.constant 0 : i32
    return %arg0, %c0_i32 : i32, i32
  }
}

</mosaic_0001>

<llo_original>
// kernel: tpu_custom_call.1
$region0: #{tpu_custom_call.1}
  #allocation0 [shape = 'u32[]', space=smem, size = 0x4, offset = 0x4, fixed_abs, tag = 'smem constant byte address 0x4 - core index']
  #allocation1 [shape = 'u32[144,128]{1,0:T(1,128)}', space=vmem, size = 0x12000, scoped, tag = 'internal scratch']
  %s0 = inlined_call_operand.vmem [shape: f32[8,11], index: 0, kind: input, shape index: {}]
  %s1 = inlined_call_operand.vmem [shape: bf16[11,50], index: 1, kind: input, shape index: {}]
  %s2 = inlined_call_operand.vmem [shape: f32[1,50], index: 2, kind: input, shape index: {}]
  %s3 = inlined_call_operand.vmem [shape: bf16[50,150], index: 3, kind: input, shape index: {}]
  %s4 = inlined_call_operand.vmem [shape: f32[1,150], index: 4, kind: input, shape index: {}]
  %s5 = inlined_call_operand.hbm [shape: bf16[150,150], index: 5, kind: input, shape index: {}]
  %s6 = inlined_call_operand.vmem [shape: f32[1,150], index: 6, kind: input, shape index: {}]
  %s7 = inlined_call_operand.vmem [shape: bf16[150,25], index: 7, kind: input, shape index: {}]
  %s8 = inlined_call_operand.vmem [shape: f32[1,25], index: 8, kind: input, shape index: {}]
  %s9 = inlined_call_operand.vmem [shape: bf16[25,25], index: 9, kind: input, shape index: {}]
  %s10 = inlined_call_operand.vmem [shape: f32[1,25], index: 10, kind: input, shape index: {}]
  %s11 = inlined_call_operand.vmem [shape: bf16[25,2], index: 11, kind: input, shape index: {}]
  %s12 = inlined_call_operand.vmem [shape: f32[1,2], index: 12, kind: input, shape index: {}]
  %s13 = inlined_call_operand.vmem [shape: f32[8,2], index: 13, kind: output, shape index: {}]
  %s14 = sld [smem:[#allocation0]]
  $region66: #{tpu_custom_call.1} parent=0
    _
  %s16 = ssub.s32 1, %s14
  %s17 = scalar_select 0, %s16, %s14
  $region1: #{tpu_custom_call.1} parent=0
    #allocation2 [shape = 'u8[77824]{0}', space=vmem, size = 0x13000, scoped, tag = 'input window, operand 5, single buffered']
    #allocation3 [shape = 's32[1]{0}', space=sflag, size = 0x4, scoped, tag = 'scoped memory for tpu_custom_call.1']
    %18 = vsyncpa [#allocation3], 0
    // Predicated region
    $region2: #{tpu_custom_call.1} parent=1 // pred_check
      _
    $region3: #{tpu_custom_call.1} parent=1 // pred_check_branch
      %20 = sbr.rel (0) target = $region5
    $region4: #{tpu_custom_call.1} parent=1 // pred_region
      _
    $region5: #{tpu_custom_call.1} parent=1 // pred_fallthru
      _
    // Predicated region
    $region6: #{tpu_custom_call.1} parent=1 // pred_check
      _
    $region7: #{tpu_custom_call.1} parent=1 // pred_check_branch
      %22 = sbr.rel (0) target = $region9
    $region8: #{tpu_custom_call.1} parent=1 // pred_region
      _
    $region9: #{tpu_custom_call.1} parent=1 // pred_fallthru
      _
    // Predicated region
    $region10: #{tpu_custom_call.1} parent=1 // pred_check
      _
    $region11: #{tpu_custom_call.1} parent=1 // pred_check_branch
      %24 = sbr.rel (0) target = $region13
    $region12: #{tpu_custom_call.1} parent=1 // pred_region
      _
    $region13: #{tpu_custom_call.1} parent=1 // pred_fallthru
      _
    // Predicated region
    $region14: #{tpu_custom_call.1} parent=1 // pred_check
      _
    $region15: #{tpu_custom_call.1} parent=1 // pred_check_branch
      %26 = sbr.rel (0) target = $region17
    $region16: #{tpu_custom_call.1} parent=1 // pred_region
      _
    $region17: #{tpu_custom_call.1} parent=1 // pred_fallthru
      _
    // Predicated region
    $region18: #{tpu_custom_call.1} parent=1 // pred_check
      _
    $region19: #{tpu_custom_call.1} parent=1 // pred_check_branch
      %28 = sbr.rel (0) target = $region21
    $region20: #{tpu_custom_call.1} parent=1 // pred_region
      _
    $region21: #{tpu_custom_call.1} parent=1 // pred_fallthru
      _
    // Predicated region
    $region22: #{tpu_custom_call.1} parent=1 // pred_check
      _
    $region23: #{tpu_custom_call.1} parent=1 // pred_check_branch
      %30 = sbr.rel (0) target = $region25
    $region24: #{tpu_custom_call.1} parent=1 // pred_region
      %s32 = ssub.s32 2432, 2432
      %33 = vsyncadd [#allocation3], %s32
      %s34 = sshll.u32 [#allocation2], 4
      %s35 = int_to_ptr.vmem [resolvable:$true] %s34
      %40 = dma.hbm_to_vmem [thread:$0]  %s5, 2432, %s35, [#allocation3], 128, 128, 8
    $region25: #{tpu_custom_call.1} parent=1 // pred_fallthru
      _
    // Predicated region
    $region26: #{tpu_custom_call.1} parent=1 // pred_check
      _
    $region27: #{tpu_custom_call.1} parent=1 // pred_check_branch
      %42 = sbr.rel (0) target = $region29
    $region28: #{tpu_custom_call.1} parent=1 // pred_region
      _
    $region29: #{tpu_custom_call.1} parent=1 // pred_fallthru
      _
    // Predicated region
    $region30: #{tpu_custom_call.1} parent=1 // pred_check
      _
    $region31: #{tpu_custom_call.1} parent=1 // pred_check_branch
      %44 = sbr.rel (0) target = $region33
    $region32: #{tpu_custom_call.1} parent=1 // pred_region
      _
    $region33: #{tpu_custom_call.1} parent=1 // pred_fallthru
      _
    // Predicated region
    $region34: #{tpu_custom_call.1} parent=1 // pred_check
      _
    $region35: #{tpu_custom_call.1} parent=1 // pred_check_branch
      %46 = sbr.rel (0) target = $region37
    $region36: #{tpu_custom_call.1} parent=1 // pred_region
      _
    $region37: #{tpu_custom_call.1} parent=1 // pred_fallthru
      _
    // Predicated region
    $region38: #{tpu_custom_call.1} parent=1 // pred_check
      _
    $region39: #{tpu_custom_call.1} parent=1 // pred_check_branch
      %48 = sbr.rel (0) target = $region41
    $region40: #{tpu_custom_call.1} parent=1 // pred_region
      _
    $region41: #{tpu_custom_call.1} parent=1 // pred_fallthru
      _
    // Predicated region
    $region42: #{tpu_custom_call.1} parent=1 // pred_check
      _
    $region43: #{tpu_custom_call.1} parent=1 // pred_check_branch
      %50 = sbr.rel (0) target = $region45
    $region44: #{tpu_custom_call.1} parent=1 // pred_region
      _
    $region45: #{tpu_custom_call.1} parent=1 // pred_fallthru
      _
    // Predicated region
    $region46: #{tpu_custom_call.1} parent=1 // pred_check
      _
    $region47: #{tpu_custom_call.1} parent=1 // pred_check_branch
      %52 = sbr.rel (0) target = $region49
    $region48: #{tpu_custom_call.1} parent=1 // pred_region
      _
    $region49: #{tpu_custom_call.1} parent=1 // pred_fallthru
      _
    // Predicated region
    $region50: #{tpu_custom_call.1} parent=1 // pred_check
      _
    $region51: #{tpu_custom_call.1} parent=1 // pred_check_branch
      %54 = sbr.rel (0) target = $region53
    $region52: #{tpu_custom_call.1} parent=1 // pred_region
      _
    $region53: #{tpu_custom_call.1} parent=1 // pred_fallthru
      _
    // Predicated region
    $region54: #{tpu_custom_call.1} parent=1 // pred_check
      _
    $region55: #{tpu_custom_call.1} parent=1 // pred_check_branch
      %56 = sbr.rel (0) target = $region57
    $region56: #{tpu_custom_call.1} parent=1 // pred_region
      %57 = dma.done [#allocation3], 2432
    $region57: #{tpu_custom_call.1} parent=1 // pred_fallthru
      _
    %v59 = vld [vmem:[%s0] sm:$0xff]
    %v60 = vpack.c.bf16 %v59, %v59
    %v61 = vld [vmem:[%s1] sm:$0xf]
    %v62 = vld [vmem:[%s1 + $0x4] sm:$0x3]
    %v63 = vld [vmem:[%s2] sm:$0x1]
    %v65 = vlaneseq
    %v66 = vshrl.u32 %v65, 7
    %v67 = vsub.s32 0, %v66
    %v68 = vrot.slane %v63, %v67
    %v72 = vunpack.c.l.b16 %v61
    %v73 = vunpack.c.l.b16 %v62
    %v74 = vpack.c.b16 %v73, %v72
    %vm75 = vcmask 89088
    %v77 = vsel %vm75, %v60, 0
    %vm79 = vcmask 1044480
    %vm80 = vcmask 1045504
    %v81 = vsel %vm79, 4294967295, 65535
    %v82 = vsel %vm80, %v81, 0
    %v84 = vand.u32 %v74, %v82
    %86 = vmatprep.subr.bf16.mxu0 0
    %87 = vmatpush1.bf16.msra.mxu0 %v84
    %88 = vmatprep.subr.bf16.mxu0 0
    %89 = vmatpush1.bf16.msra.mxu0 0
    %90 = vmatprep.subr.bf16.mxu0 0
    %91 = vmatpush1.bf16.msra.mxu0 0
    %92 = vmatprep.subr.bf16.mxu0 0
    %93 = vmatpush1.bf16.msra.mxu0 0
    %94 = vmatprep.subr.bf16.mxu0 0
    %95 = vmatpush1.bf16.msra.mxu0 0
    %96 = vmatprep.subr.bf16.mxu0 0
    %97 = vmatpush1.bf16.msra.mxu0 0
    %98 = vmatprep.subr.bf16.mxu0 0
    %99 = vmatpush1.bf16.msra.mxu0 0
    %100 = vmatprep.subr.bf16.mxu0 0
    %101 = vmatpush1.bf16.msra.mxu0 0
    %102 = vmatprep.subr.bf16.mxu0 0
    %103 = vmatpush1.bf16.msra.mxu0 0
    %104 = vmatprep.subr.bf16.mxu0 0
    %105 = vmatpush1.bf16.msra.mxu0 0
    %106 = vmatprep.subr.bf16.mxu0 0
    %107 = vmatpush1.bf16.msra.mxu0 0
    %108 = vmatprep.subr.bf16.mxu0 0
    %109 = vmatpush1.bf16.msra.mxu0 0
    %110 = vmatprep.subr.bf16.mxu0 0
    %111 = vmatpush1.bf16.msra.mxu0 0
    %112 = vmatprep.subr.bf16.mxu0 0
    %113 = vmatpush1.bf16.msra.mxu0 0
    %114 = vmatprep.subr.bf16.mxu0 0
    %115 = vmatpush1.bf16.msra.mxu0 0
    %116 = vmatprep.subr.bf16.mxu0 0
    %117 = vmatpush1.bf16.msra.mxu0 0
    %118 = vmatprep.mubr.bf16.mxu0 0
    %119 = vmatmul.mubr.bf16.gmra.mrb[0].mxu0 %v77
    %v120 = vpop.f32.mrb[0].mxu0
    %v121 = vadd.f32 %v68, %v120
    %v122 = vpop.f32.mrb[0].mxu0
    %v123 = vpop.f32.mrb[0].mxu0
    %v124 = vpop.f32.mrb[0].mxu0
    %125 = vdwg.mxu0
    %v126 = vmax.f32 %v121, 0.0
    %v127 = vpack.c.bf16 %v126, %v126
    %v128 = vld [vmem:[%s3] sm:$0xff]
    %v129 = vld [vmem:[%s3 + $0x8] sm:$0xff]
    %v130 = vld [vmem:[%s3 + $0x10] sm:$0xff]
    %v131 = vld [vmem:[%s3 + $0x18] sm:$0xff]
    %v132 = vld [vmem:[%s3 + $0x20] sm:$0xff]
    %v133 = vld [vmem:[%s3 + $0x28] sm:$0xff]
    %v134 = vld [vmem:[%s3 + $0x30] sm:$0x11]
    %v135 = vld [vmem:[%s4] sm:$0x3]
    %v137 = vlaneseq
    %v138 = vshrl.u32 %v137, 7
    %v139 = vsub.s32 0, %v138
    %v140 = vrot.slane %v135, %v139
    %v141 = vlaneseq
    %v142 = vshrl.u32 %v141, 7
    %v143 = vsub.s32 1, %v142
    %v144 = vrot.slane %v135, %v143
    %v154 = vunpack.c.l.b16 %v128
    %v155 = vunpack.c.h.b16 %v128
    %v156 = vunpack.c.l.b16 %v129
    %v157 = vunpack.c.h.b16 %v129
    %v158 = vunpack.c.l.b16 %v130
    %v159 = vunpack.c.h.b16 %v130
    %v160 = vunpack.c.l.b16 %v131
    %v161 = vunpack.c.h.b16 %v131
    %v162 = vunpack.c.l.b16 %v132
    %v163 = vunpack.c.h.b16 %v132
    %v164 = vunpack.c.l.b16 %v133
    %v165 = vunpack.c.h.b16 %v133
    %v166 = vunpack.c.l.b16 %v134
    %v167 = vunpack.c.h.b16 %v134
    %v168 = vpack.c.b16 %v156, %v154
    %v169 = vpack.c.b16 %v157, %v155
    %v170 = vpack.c.b16 %v160, %v158
    %v171 = vpack.c.b16 %v161, %v159
    %v172 = vpack.c.b16 %v164, %v162
    %v173 = vpack.c.b16 %v165, %v163
    %v174 = vpack.c.b16 %v166, %v166
    %v175 = vpack.c.b16 %v167, %v167
    %vm182 = vcmask 408576
    %v184 = vsel %vm182, %v127, 0
    %vm186 = vcmask 1040384
    %v188 = vsel %vm186, %v174, 0
    %v191 = vsel %vm186, %v175, 0
    %193 = vmatprep.subr.bf16.mxu0 %v169
    %194 = vmatpush1.bf16.msra.mxu0 %v168
    %195 = vmatprep.subr.bf16.mxu0 %v171
    %196 = vmatpush1.bf16.msra.mxu0 %v170
    %197 = vmatprep.subr.bf16.mxu0 %v173
    %198 = vmatpush1.bf16.msra.mxu0 %v172
    %199 = vmatprep.subr.bf16.mxu0 %v191
    %200 = vmatpush1.bf16.msra.mxu0 %v188
    %201 = vmatprep.subr.bf16.mxu0 0
    %202 = vmatpush1.bf16.msra.mxu0 0
    %203 = vmatprep.subr.bf16.mxu0 0
    %204 = vmatpush1.bf16.msra.mxu0 0
    %205 = vmatprep.subr.bf16.mxu0 0
    %206 = vmatpush1.bf16.msra.mxu0 0
    %207 = vmatprep.subr.bf16.mxu0 0
    %208 = vmatpush1.bf16.msra.mxu0 0
    %209 = vmatprep.subr.bf16.mxu0 0
    %210 = vmatpush1.bf16.msra.mxu0 0
    %211 = vmatprep.subr.bf16.mxu0 0
    %212 = vmatpush1.bf16.msra.mxu0 0
    %213 = vmatprep.subr.bf16.mxu0 0
    %214 = vmatpush1.bf16.msra.mxu0 0
    %215 = vmatprep.subr.bf16.mxu0 0
    %216 = vmatpush1.bf16.msra.mxu0 0
    %217 = vmatprep.subr.bf16.mxu0 0
    %218 = vmatpush1.bf16.msra.mxu0 0
    %219 = vmatprep.subr.bf16.mxu0 0
    %220 = vmatpush1.bf16.msra.mxu0 0
    %221 = vmatprep.subr.bf16.mxu0 0
    %222 = vmatpush1.bf16.msra.mxu0 0
    %223 = vmatprep.subr.bf16.mxu0 0
    %224 = vmatpush1.bf16.msra.mxu0 0
    %225 = vmatprep.mubr.bf16.mxu0 0
    %226 = vmatmul.mubr.bf16.gmra.mrb[0].mxu0 %v184
    %v227 = vpop.f32.mrb[0].mxu0
    %v228 = vadd.f32 %v140, %v227
    %v229 = vpop.f32.mrb[0].mxu0
    %v230 = vadd.f32 %v144, %v229
    %v231 = vpop.f32.mrb[0].mxu0
    %v232 = vpop.f32.mrb[0].mxu0
    %233 = vdwg.mxu0
    %v234 = vmax.f32 %v228, 0.0
    %v235 = vmax.f32 %v230, 0.0
    %v236 = vpack.c.bf16 %v234, %v234
    %v237 = vpack.c.bf16 %v235, %v235
    %v238 = vld [vmem:[#allocation2] sm:$0xff]
    %v239 = vld [vmem:[#allocation2 + $0x8] sm:$0xff]
    %v240 = vld [vmem:[#allocation2 + $0x10] sm:$0xff]
    %v241 = vld [vmem:[#allocation2 + $0x18] sm:$0xff]
    %v242 = vld [vmem:[#allocation2 + $0x20] sm:$0xff]
    %v243 = vld [vmem:[#allocation2 + $0x28] sm:$0xff]
    %v244 = vld [vmem:[#allocation2 + $0x30] sm:$0xff]
    %v245 = vld [vmem:[#allocation2 + $0x38] sm:$0xff]
    %v246 = vld [vmem:[#allocation2 + $0x40] sm:$0xff]
    %v247 = vld [vmem:[#allocation2 + $0x48] sm:$0xff]
    %v248 = vld [vmem:[#allocation2 + $0x50] sm:$0xff]
    %v249 = vld [vmem:[#allocation2 + $0x58] sm:$0xff]
    %v250 = vld [vmem:[#allocation2 + $0x60] sm:$0xff]
    %v251 = vld [vmem:[#allocation2 + $0x68] sm:$0xff]
    %v252 = vld [vmem:[#allocation2 + $0x70] sm:$0xff]
    %v253 = vld [vmem:[#allocation2 + $0x78] sm:$0xff]
    %v254 = vld [vmem:[#allocation2 + $0x80] sm:$0xff]
    %v255 = vld [vmem:[#allocation2 + $0x88] sm:$0xff]
    %v256 = vld [vmem:[#allocation2 + $0x90] sm:$0x77]
    %v257 = vld [vmem:[%s6] sm:$0x3]
    %v259 = vlaneseq
    %v260 = vshrl.u32 %v259, 7
    %v261 = vsub.s32 0, %v260
    %v262 = vrot.slane %v257, %v261
    %v263 = vlaneseq
    %v264 = vshrl.u32 %v263, 7
    %v265 = vsub.s32 1, %v264
    %v266 = vrot.slane %v257, %v265
    %v288 = vunpack.c.l.b16 %v238
    %v289 = vunpack.c.h.b16 %v238
    %v290 = vunpack.c.l.b16 %v239
    %v291 = vunpack.c.h.b16 %v239
    %v292 = vunpack.c.l.b16 %v240
    %v293 = vunpack.c.h.b16 %v240
    %v294 = vunpack.c.l.b16 %v241
    %v295 = vunpack.c.h.b16 %v241
    %v296 = vunpack.c.l.b16 %v242
    %v297 = vunpack.c.h.b16 %v242
    %v298 = vunpack.c.l.b16 %v243
    %v299 = vunpack.c.h.b16 %v243
    %v300 = vunpack.c.l.b16 %v244
    %v301 = vunpack.c.h.b16 %v244
    %v302 = vunpack.c.l.b16 %v245
    %v303 = vunpack.c.h.b16 %v245
    %v304 = vunpack.c.l.b16 %v246
    %v305 = vunpack.c.h.b16 %v246
    %v306 = vunpack.c.l.b16 %v247
    %v307 = vunpack.c.h.b16 %v247
    %v308 = vunpack.c.l.b16 %v248
    %v309 = vunpack.c.h.b16 %v248
    %v310 = vunpack.c.l.b16 %v249
    %v311 = vunpack.c.h.b16 %v249
    %v312 = vunpack.c.l.b16 %v250
    %v313 = vunpack.c.h.b16 %v250
    %v314 = vunpack.c.l.b16 %v251
    %v315 = vunpack.c.h.b16 %v251
    %v316 = vunpack.c.l.b16 %v252
    %v317 = vunpack.c.h.b16 %v252
    %v318 = vunpack.c.l.b16 %v253
    %v319 = vunpack.c.h.b16 %v253
    %v320 = vunpack.c.l.b16 %v254
    %v321 = vunpack.c.h.b16 %v254
    %v322 = vunpack.c.l.b16 %v255
    %v323 = vunpack.c.h.b16 %v255
    %v324 = vunpack.c.l.b16 %v256
    %v325 = vunpack.c.h.b16 %v256
    %v326 = vpack.c.b16 %v290, %v288
    %v327 = vpack.c.b16 %v291, %v289
    %v328 = vpack.c.b16 %v294, %v292
    %v329 = vpack.c.b16 %v295, %v293
    %v330 = vpack.c.b16 %v298, %v296
    %v331 = vpack.c.b16 %v299, %v297
    %v332 = vpack.c.b16 %v302, %v300
    %v333 = vpack.c.b16 %v303, %v301
    %v334 = vpack.c.b16 %v306, %v304
    %v335 = vpack.c.b16 %v307, %v305
    %v336 = vpack.c.b16 %v310, %v308
    %v337 = vpack.c.b16 %v311, %v309
    %v338 = vpack.c.b16 %v314, %v312
    %v339 = vpack.c.b16 %v315, %v313
    %v340 = vpack.c.b16 %v318, %v316
    %v341 = vpack.c.b16 %v319, %v317
    %v342 = vpack.c.b16 %v322, %v320
    %v343 = vpack.c.b16 %v323, %v321
    %v344 = vpack.c.b16 %v324, %v324
    %v345 = vpack.c.b16 %v325, %v325
    %vm364 = vcmask 179200
    %v366 = vsel %vm364, %v237, 0
    %vm368 = vcmask 1042432
    %v370 = vsel %vm368, %v344, 0
    %v373 = vsel %vm368, %v345, 0
    %375 = vmatprep.subr.bf16.mxu0 %v327
    %376 = vmatpush1.bf16.msra.mxu0 %v326
    %377 = vmatprep.subr.bf16.mxu0 %v329
    %378 = vmatpush1.bf16.msra.mxu0 %v328
    %379 = vmatprep.subr.bf16.mxu0 %v331
    %380 = vmatpush1.bf16.msra.mxu0 %v330
    %381 = vmatprep.subr.bf16.mxu0 %v333
    %382 = vmatpush1.bf16.msra.mxu0 %v332
    %383 = vmatprep.subr.bf16.mxu0 %v335
    %384 = vmatpush1.bf16.msra.mxu0 %v334
    %385 = vmatprep.subr.bf16.mxu0 %v337
    %386 = vmatpush1.bf16.msra.mxu0 %v336
    %387 = vmatprep.subr.bf16.mxu0 %v339
    %388 = vmatpush1.bf16.msra.mxu0 %v338
    %389 = vmatprep.subr.bf16.mxu0 %v341
    %390 = vmatpush1.bf16.msra.mxu0 %v340
    %391 = vmatprep.subr.bf16.mxu0 %v343
    %392 = vmatpush1.bf16.msra.mxu0 %v342
    %393 = vmatprep.subr.bf16.mxu0 %v373
    %394 = vmatpush1.bf16.msra.mxu0 %v370
    %395 = vmatprep.subr.bf16.mxu0 0
    %396 = vmatpush1.bf16.msra.mxu0 0
    %397 = vmatprep.subr.bf16.mxu0 0
    %398 = vmatpush1.bf16.msra.mxu0 0
    %399 = vmatprep.subr.bf16.mxu0 0
    %400 = vmatpush1.bf16.msra.mxu0 0
    %401 = vmatprep.subr.bf16.mxu0 0
    %402 = vmatpush1.bf16.msra.mxu0 0
    %403 = vmatprep.subr.bf16.mxu0 0
    %404 = vmatpush1.bf16.msra.mxu0 0
    %405 = vmatprep.subr.bf16.mxu0 0
    %406 = vmatpush1.bf16.msra.mxu0 0
    %407 = vmatprep.mubr.bf16.mxu0 %v366
    %408 = vmatmul.mubr.bf16.gmra.mrb[0].mxu0 %v236
    %v409 = vpop.f32.mrb[0].mxu0
    %v410 = vadd.f32 %v262, %v409
    %v411 = vpop.f32.mrb[0].mxu0
    %v412 = vadd.f32 %v266, %v411
    %v413 = vpop.f32.mrb[0].mxu0
    %v414 = vpop.f32.mrb[0].mxu0
    %415 = vdwg.mxu0
    %v416 = vmax.f32 %v410, 0.0
    %v417 = vmax.f32 %v412, 0.0
    %v418 = vpack.c.bf16 %v416, %v416
    %v419 = vpack.c.bf16 %v417, %v417
    %v420 = vld [vmem:[%s7] sm:$0xf]
    %v421 = vld [vmem:[%s7 + $0x4] sm:$0xf]
    %v422 = vld [vmem:[%s7 + $0x8] sm:$0xf]
    %v423 = vld [vmem:[%s7 + $0xc] sm:$0xf]
    %v424 = vld [vmem:[%s7 + $0x10] sm:$0xf]
    %v425 = vld [vmem:[%s7 + $0x14] sm:$0xf]
    %v426 = vld [vmem:[%s7 + $0x18] sm:$0xf]
    %v427 = vld [vmem:[%s7 + $0x1c] sm:$0xf]
    %v428 = vld [vmem:[%s7 + $0x20] sm:$0xf]
    %v429 = vld [vmem:[%s7 + $0x24] sm:$0xf]
    %v430 = vld [vmem:[%s7 + $0x28] sm:$0xf]
    %v431 = vld [vmem:[%s7 + $0x2c] sm:$0xf]
    %v432 = vld [vmem:[%s7 + $0x30] sm:$0xf]
    %v433 = vld [vmem:[%s7 + $0x34] sm:$0xf]
    %v434 = vld [vmem:[%s7 + $0x38] sm:$0xf]
    %v435 = vld [vmem:[%s7 + $0x3c] sm:$0xf]
    %v436 = vld [vmem:[%s7 + $0x40] sm:$0xf]
    %v437 = vld [vmem:[%s7 + $0x44] sm:$0xf]
    %v438 = vld [vmem:[%s7 + $0x48] sm:$0x7]
    %v439 = vld [vmem:[%s8] sm:$0x1]
    %v441 = vlaneseq
    %v442 = vshrl.u32 %v441, 7
    %v443 = vsub.s32 0, %v442
    %v444 = vrot.slane %v439, %v443
    %v465 = vunpack.c.l.b16 %v420
    %v466 = vunpack.c.l.b16 %v421
    %v467 = vunpack.c.l.b16 %v422
    %v468 = vunpack.c.l.b16 %v423
    %v469 = vunpack.c.l.b16 %v424
    %v470 = vunpack.c.l.b16 %v425
    %v471 = vunpack.c.l.b16 %v426
    %v472 = vunpack.c.l.b16 %v427
    %v473 = vunpack.c.l.b16 %v428
    %v474 = vunpack.c.l.b16 %v429
    %v475 = vunpack.c.l.b16 %v430
    %v476 = vunpack.c.l.b16 %v431
    %v477 = vunpack.c.l.b16 %v432
    %v478 = vunpack.c.l.b16 %v433
    %v479 = vunpack.c.l.b16 %v434
    %v480 = vunpack.c.l.b16 %v435
    %v481 = vunpack.c.l.b16 %v436
    %v482 = vunpack.c.l.b16 %v437
    %v483 = vunpack.c.l.b16 %v438
    %v484 = vpack.c.b16 %v466, %v465
    %v485 = vpack.c.b16 %v468, %v467
    %v486 = vpack.c.b16 %v470, %v469
    %v487 = vpack.c.b16 %v472, %v471
    %v488 = vpack.c.b16 %v474, %v473
    %v489 = vpack.c.b16 %v476, %v475
    %v490 = vpack.c.b16 %v478, %v477
    %v491 = vpack.c.b16 %v480, %v479
    %v492 = vpack.c.b16 %v482, %v481
    %v493 = vpack.c.b16 %v483, %v483
    %v504 = vsel %vm364, %v419, 0
    %v507 = vsel %vm368, %v493, 0
    %509 = vmatprep.subr.bf16.mxu0 0
    %510 = vmatpush1.bf16.msra.mxu0 %v484
    %511 = vmatprep.subr.bf16.mxu0 0
    %512 = vmatpush1.bf16.msra.mxu0 %v485
    %513 = vmatprep.subr.bf16.mxu0 0
    %514 = vmatpush1.bf16.msra.mxu0 %v486
    %515 = vmatprep.subr.bf16.mxu0 0
    %516 = vmatpush1.bf16.msra.mxu0 %v487
    %517 = vmatprep.subr.bf16.mxu0 0
    %518 = vmatpush1.bf16.msra.mxu0 %v488
    %519 = vmatprep.subr.bf16.mxu0 0
    %520 = vmatpush1.bf16.msra.mxu0 %v489
    %521 = vmatprep.subr.bf16.mxu0 0
    %522 = vmatpush1.bf16.msra.mxu0 %v490
    %523 = vmatprep.subr.bf16.mxu0 0
    %524 = vmatpush1.bf16.msra.mxu0 %v491
    %525 = vmatprep.subr.bf16.mxu0 0
    %526 = vmatpush1.bf16.msra.mxu0 %v492
    %527 = vmatprep.subr.bf16.mxu0 0
    %528 = vmatpush1.bf16.msra.mxu0 %v507
    %529 = vmatprep.subr.bf16.mxu0 0
    %530 = vmatpush1.bf16.msra.mxu0 0
    %531 = vmatprep.subr.bf16.mxu0 0
    %532 = vmatpush1.bf16.msra.mxu0 0
    %533 = vmatprep.subr.bf16.mxu0 0
    %534 = vmatpush1.bf16.msra.mxu0 0
    %535 = vmatprep.subr.bf16.mxu0 0
    %536 = vmatpush1.bf16.msra.mxu0 0
    %537 = vmatprep.subr.bf16.mxu0 0
    %538 = vmatpush1.bf16.msra.mxu0 0
    %539 = vmatprep.subr.bf16.mxu0 0
    %540 = vmatpush1.bf16.msra.mxu0 0
    %541 = vmatprep.mubr.bf16.mxu0 %v504
    %542 = vmatmul.mubr.bf16.gmra.mrb[0].mxu0 %v418
    %v543 = vpop.f32.mrb[0].mxu0
    %v544 = vadd.f32 %v444, %v543
    %v545 = vpop.f32.mrb[0].mxu0
    %v546 = vpop.f32.mrb[0].mxu0
    %v547 = vpop.f32.mrb[0].mxu0
    %548 = vdwg.mxu0
    %v549 = vmax.f32 %v544, 0.0
    %v550 = vpack.c.bf16 %v549, %v549
    %v551 = vld [vmem:[%s9] sm:$0xf]
    %v552 = vld [vmem:[%s9 + $0x4] sm:$0xf]
    %v553 = vld [vmem:[%s9 + $0x8] sm:$0xf]
    %v554 = vld [vmem:[%s9 + $0xc] sm:$0x1]
    %v555 = vld [vmem:[%s10] sm:$0x1]
    %v557 = vlaneseq
    %v558 = vshrl.u32 %v557, 7
    %v559 = vsub.s32 0, %v558
    %v560 = vrot.slane %v555, %v559
    %v566 = vunpack.c.l.b16 %v551
    %v567 = vunpack.c.l.b16 %v552
    %v568 = vunpack.c.l.b16 %v553
    %v569 = vunpack.c.l.b16 %v554
    %v570 = vpack.c.b16 %v567, %v566
    %v571 = vpack.c.b16 %v569, %v568
    %vm573 = vcmask 203776
    %v575 = vsel %vm573, %v550, 0
    %vm577 = vcmask 1043456
    %v578 = vsel %vm577, 4294967295, 65535
    %v579 = vsel %vm79, %v578, 0
    %v581 = vand.u32 %v571, %v579
    %583 = vmatprep.subr.bf16.mxu0 0
    %584 = vmatpush1.bf16.msra.mxu0 %v570
    %585 = vmatprep.subr.bf16.mxu0 0
    %586 = vmatpush1.bf16.msra.mxu0 %v581
    %587 = vmatprep.subr.bf16.mxu0 0
    %588 = vmatpush1.bf16.msra.mxu0 0
    %589 = vmatprep.subr.bf16.mxu0 0
    %590 = vmatpush1.bf16.msra.mxu0 0
    %591 = vmatprep.subr.bf16.mxu0 0
    %592 = vmatpush1.bf16.msra.mxu0 0
    %593 = vmatprep.subr.bf16.mxu0 0
    %594 = vmatpush1.bf16.msra.mxu0 0
    %595 = vmatprep.subr.bf16.mxu0 0
    %596 = vmatpush1.bf16.msra.mxu0 0
    %597 = vmatprep.subr.bf16.mxu0 0
    %598 = vmatpush1.bf16.msra.mxu0 0
    %599 = vmatprep.subr.bf16.mxu0 0
    %600 = vmatpush1.bf16.msra.mxu0 0
    %601 = vmatprep.subr.bf16.mxu0 0
    %602 = vmatpush1.bf16.msra.mxu0 0
    %603 = vmatprep.subr.bf16.mxu0 0
    %604 = vmatpush1.bf16.msra.mxu0 0
    %605 = vmatprep.subr.bf16.mxu0 0
    %606 = vmatpush1.bf16.msra.mxu0 0
    %607 = vmatprep.subr.bf16.mxu0 0
    %608 = vmatpush1.bf16.msra.mxu0 0
    %609 = vmatprep.subr.bf16.mxu0 0
    %610 = vmatpush1.bf16.msra.mxu0 0
    %611 = vmatprep.subr.bf16.mxu0 0
    %612 = vmatpush1.bf16.msra.mxu0 0
    %613 = vmatprep.subr.bf16.mxu0 0
    %614 = vmatpush1.bf16.msra.mxu0 0
    %615 = vmatprep.mubr.bf16.mxu0 0
    %616 = vmatmul.mubr.bf16.gmra.mrb[0].mxu0 %v575
    %v617 = vpop.f32.mrb[0].mxu0
    %v618 = vadd.f32 %v560, %v617
    %v619 = vpop.f32.mrb[0].mxu0
    %v620 = vpop.f32.mrb[0].mxu0
    %v621 = vpop.f32.mrb[0].mxu0
    %622 = vdwg.mxu0
    %v623 = vmax.f32 %v618, 0.0
    %v624 = vpack.c.bf16 %v623, %v623
    %v625 = vld [vmem:[%s11] sm:$0xf]
    %v626 = vld [vmem:[%s11 + $0x4] sm:$0xf]
    %v627 = vld [vmem:[%s11 + $0x8] sm:$0xf]
    %v628 = vld [vmem:[%s11 + $0xc] sm:$0x1]
    %v629 = vld [vmem:[%s12] sm:$0x1]
    %v631 = vlaneseq
    %v632 = vshrl.u32 %v631, 7
    %v633 = vsub.s32 0, %v632
    %v634 = vrot.slane %v629, %v633
    %v640 = vunpack.c.l.b16 %v625
    %v641 = vunpack.c.l.b16 %v626
    %v642 = vunpack.c.l.b16 %v627
    %v643 = vunpack.c.l.b16 %v628
    %v644 = vpack.c.b16 %v641, %v640
    %v645 = vpack.c.b16 %v643, %v642
    %v648 = vsel %vm573, %v624, 0
    %v651 = vand.u32 %v645, %v579
    %653 = vmatprep.subr.bf16.mxu0 0
    %654 = vmatpush1.bf16.msra.mxu0 %v644
    %655 = vmatprep.subr.bf16.mxu0 0
    %656 = vmatpush1.bf16.msra.mxu0 %v651
    %657 = vmatprep.subr.bf16.mxu0 0
    %658 = vmatpush1.bf16.msra.mxu0 0
    %659 = vmatprep.subr.bf16.mxu0 0
    %660 = vmatpush1.bf16.msra.mxu0 0
    %661 = vmatprep.subr.bf16.mxu0 0
    %662 = vmatpush1.bf16.msra.mxu0 0
    %663 = vmatprep.subr.bf16.mxu0 0
    %664 = vmatpush1.bf16.msra.mxu0 0
    %665 = vmatprep.subr.bf16.mxu0 0
    %666 = vmatpush1.bf16.msra.mxu0 0
    %667 = vmatprep.subr.bf16.mxu0 0
    %668 = vmatpush1.bf16.msra.mxu0 0
    %669 = vmatprep.subr.bf16.mxu0 0
    %670 = vmatpush1.bf16.msra.mxu0 0
    %671 = vmatprep.subr.bf16.mxu0 0
    %672 = vmatpush1.bf16.msra.mxu0 0
    %673 = vmatprep.subr.bf16.mxu0 0
    %674 = vmatpush1.bf16.msra.mxu0 0
    %675 = vmatprep.subr.bf16.mxu0 0
    %676 = vmatpush1.bf16.msra.mxu0 0
    %677 = vmatprep.subr.bf16.mxu0 0
    %678 = vmatpush1.bf16.msra.mxu0 0
    %679 = vmatprep.subr.bf16.mxu0 0
    %680 = vmatpush1.bf16.msra.mxu0 0
    %681 = vmatprep.subr.bf16.mxu0 0
    %682 = vmatpush1.bf16.msra.mxu0 0
    %683 = vmatprep.subr.bf16.mxu0 0
    %684 = vmatpush1.bf16.msra.mxu0 0
    %685 = vmatprep.mubr.bf16.mxu0 0
    %686 = vmatmul.mubr.bf16.gmra.mrb[0].mxu0 %v648
    %v687 = vpop.f32.mrb[0].mxu0
    %v688 = vadd.f32 %v634, %v687
    %v689 = vpop.f32.mrb[0].mxu0
    %v690 = vpop.f32.mrb[0].mxu0
    %v691 = vpop.f32.mrb[0].mxu0
    %692 = vdwg.mxu0
    %vm693 = vcmask 15360
    %694 = vst.msk [vmem:[%s13] sm:$0xff] %vm693, %v688
    // Predicated region
    $region58: #{tpu_custom_call.1} parent=1 // pred_check
      _
    $region59: #{tpu_custom_call.1} parent=1 // pred_check_branch
      %696 = sbr.rel (0) target = $region61
    $region60: #{tpu_custom_call.1} parent=1 // pred_region
      _
    $region61: #{tpu_custom_call.1} parent=1 // pred_fallthru
      _
    // Predicated region
    $region62: #{tpu_custom_call.1} parent=1 // pred_check
      _
    $region63: #{tpu_custom_call.1} parent=1 // pred_check_branch
      %698 = sbr.rel (0) target = $region65
    $region64: #{tpu_custom_call.1} parent=1 // pred_region
      _
    $region65: #{tpu_custom_call.1} parent=1 // pred_fallthru
      _
    %699 = vsyncpa [#allocation3], 1

</llo_original>
